<compile_context>
chip_gen: v7x
topology: tpu7x:2x2x1
jax: 0.10.0
libtpu: 0.0.40
codegen_flags: <defaults>
</compile_context>

<pallas_src>
import functools

import jax
import jax.numpy as jnp
from jax.experimental import pallas as pl
from jax.experimental.pallas import tpu as pltpu


def _round_up(x, m):
    return ((x + m - 1) // m) * m


# ---------------------------------------------------------------------------
# Parameter preparation (run once, NOT in the per-step path).
# ---------------------------------------------------------------------------
def prepare_rnn_params(w_i2h, b_i2h, w_i2o, b_i2o, input_size):
    """Fuse PyTorch-layout Linear params into MXU-friendly slabs.

    w_i2h: (H, I+H), b_i2h: (H,), w_i2o: (O, I+H), b_i2o: (O,)

    Returns (wx, wh, bias, H, O) with
      wx   : (I, Npad)  x-part of the fused weight
      wh   : (H, Npad)  h-part of the fused weight
      bias : (1, Npad)
    where Npad = round_up(H + O, 128) and fused columns are
    [hidden | output | zero-pad]  (lane-dense output slab).
    """
    H = w_i2h.shape[0]
    O = w_i2o.shape[0]
    I = input_size
    N = H + O
    n_pad = _round_up(N, 128)

    w_full = jnp.transpose(jnp.concatenate([w_i2h, w_i2o], axis=0))  # (I+H, H+O)
    w_full = jnp.pad(w_full, ((0, 0), (0, n_pad - N)))               # (I+H, Npad)
    wx = w_full[:I, :]                                               # (I, Npad)
    wh = w_full[I:, :]                                               # (H, Npad)
    bias = jnp.pad(jnp.concatenate([b_i2h, b_i2o]), (0, n_pad - N)).reshape(1, n_pad)
    return wx, wh, bias, H, O


# ---------------------------------------------------------------------------
# Single-step cell kernel:  fused = x @ Wx + h @ Wh + b   (one (B, Npad) store)
# ---------------------------------------------------------------------------
def _rnn_cell_kernel(x_ref, h_ref, wx_ref, wh_ref, b_ref, out_ref):
    fused = (jnp.dot(x_ref[...], wx_ref[...], preferred_element_type=jnp.float32)
             + jnp.dot(h_ref[...], wh_ref[...], preferred_element_type=jnp.float32)
             + b_ref[...])
    out_ref[...] = fused.astype(out_ref.dtype)


def rnn_cell(x, h, params):
    """forward(input, hidden) -> (output, hidden); matches the PyTorch RNN module."""
    wx, wh, bias, H, O = params
    B, I = x.shape
    n_pad = wx.shape[1]
    b_pad = _round_up(B, 8)                 # sublane-align the batch
    if b_pad != B:
        x = jnp.pad(x, ((0, b_pad - B), (0, 0)))
        h = jnp.pad(h, ((0, b_pad - B), (0, 0)))

    vmem = pl.BlockSpec(memory_space=pltpu.MemorySpace.VMEM)
    cost = pl.CostEstimate(
        flops=2 * b_pad * (I + H) * n_pad,
        transcendentals=0,
        bytes_accessed=4 * (b_pad * (I + H + n_pad) + (I + H + 1) * n_pad),
    )
    fused = pl.pallas_call(
        _rnn_cell_kernel,
        out_shape=jax.ShapeDtypeStruct((b_pad, n_pad), x.dtype),
        in_specs=[vmem, vmem, vmem, vmem, vmem],
        out_specs=vmem,
        cost_estimate=cost,
    )(x, h, wx, wh, bias)

    # fused columns are [hidden | output | pad]; module returns (output, hidden).
    return fused[:B, H:H + O], fused[:B, :H]


# ---------------------------------------------------------------------------
# Whole-sequence kernel: grid=(T,), weights VMEM-resident, hidden in scratch.
# ---------------------------------------------------------------------------
def _rnn_seq_kernel(x_ref, h0_ref, wx_ref, wh_ref, b_ref, y_ref, h_scr, *,
                    hidden_size):
    @pl.when(pl.program_id(0) == 0)
    def _():
        h_scr[...] = h0_ref[...]

    fused = (jnp.dot(x_ref[...], wx_ref[...], preferred_element_type=jnp.float32)
             + jnp.dot(h_scr[...], wh_ref[...], preferred_element_type=jnp.float32)
             + b_ref[...])
    y_ref[...] = fused.astype(y_ref.dtype)
    h_scr[...] = fused[:, :hidden_size]      # carry hidden to the next step


def rnn_sequence(xs, h0, params):
    """Apply the cell over a whole sequence inside ONE kernel launch.

    xs: (T, B, I), h0: (B, H)  ->  (outputs (T, B, O), final_hidden (B, H))
    """
    wx, wh, bias, H, O = params
    T, B, I = xs.shape
    n_pad = wx.shape[1]
    b_pad = _round_up(B, 8)
    if b_pad != B:
        xs = jnp.pad(xs, ((0, 0), (0, b_pad - B), (0, 0)))
        h0 = jnp.pad(h0, ((0, b_pad - B), (0, 0)))

    kernel = functools.partial(_rnn_seq_kernel, hidden_size=H)
    cost = pl.CostEstimate(
        flops=2 * T * b_pad * (I + H) * n_pad,
        transcendentals=0,
        bytes_accessed=4 * (T * b_pad * (I + n_pad) + b_pad * H
                            + (I + H + 1) * n_pad),
    )
    ys = pl.pallas_call(
        kernel,
        out_shape=jax.ShapeDtypeStruct((T, b_pad, n_pad), xs.dtype),
        grid=(T,),
        in_specs=[
            pl.BlockSpec((None, b_pad, I), lambda t: (t, 0, 0)),   # x_t (pipelined)
            pl.BlockSpec((b_pad, H), lambda t: (0, 0)),            # h0 (resident)
            pl.BlockSpec((I, n_pad), lambda t: (0, 0)),            # wx (resident)
            pl.BlockSpec((H, n_pad), lambda t: (0, 0)),            # wh (resident)
            pl.BlockSpec((1, n_pad), lambda t: (0, 0)),            # bias (resident)
        ],
        out_specs=pl.BlockSpec((None, b_pad, n_pad), lambda t: (t, 0, 0)),
        scratch_shapes=[pltpu.VMEM((b_pad, H), jnp.float32)],
        compiler_params=pltpu.CompilerParams(
            dimension_semantics=("arbitrary",),   # recurrence is sequential in time
        ),
        cost_estimate=cost,
    )(xs, h0, wx, wh, bias)

    outputs = ys[:, :B, H:H + O]
    final_hidden = ys[T - 1, :B, :H]
    return outputs, final_hidden


# ---------------------------------------------------------------------------
# Init + self-test
# ---------------------------------------------------------------------------
def _init_linear(key, out_features, in_features):
    """PyTorch nn.Linear-style init: U(-1/sqrt(fan_in), 1/sqrt(fan_in))."""
    k_w, k_b = jax.random.split(key)
    bound = 1.0 / jnp.sqrt(in_features)
    w = jax.random.uniform(k_w, (out_features, in_features), jnp.float32,
                           minval=-bound, maxval=bound)
    b = jax.random.uniform(k_b, (out_features,), jnp.float32,
                           minval=-bound, maxval=bound)
    return w, b


if __name__ == "__main__":
    batch = 2
    input_size = 16
    hidden_size = 32
    output_size = 8
    seq_len = 8

    key = jax.random.PRNGKey(0)
    k_x, k_h, k_i2h, k_i2o, k_seq = jax.random.split(key, 5)

    x = jax.random.normal(k_x, (batch, input_size), jnp.float32)
    h0 = jax.random.normal(k_h, (batch, hidden_size), jnp.float32)
    xs = jax.random.normal(k_seq, (seq_len, batch, input_size), jnp.float32)

    w_i2h, b_i2h = _init_linear(k_i2h, hidden_size, input_size + hidden_size)
    w_i2o, b_i2o = _init_linear(k_i2o, output_size, input_size + hidden_size)

    # One-time parameter fusion (outside the per-step path).
    params = prepare_rnn_params(w_i2h, b_i2h, w_i2o, b_i2o, input_size)

    # --- single-step cell: forward(input, hidden) -> (output, hidden) -------
    out, hid = rnn_cell(x, h0, params)
    jax.block_until_ready((out, hid))

    combined = jnp.concatenate([x, h0], axis=1)
    ref_hid = combined @ w_i2h.T + b_i2h
    ref_out = combined @ w_i2o.T + b_i2o
    assert out.shape == (batch, output_size) and hid.shape == (batch, hidden_size)
    assert jnp.allclose(out, ref_out, atol=1e-5), "cell output mismatch"
    assert jnp.allclose(hid, ref_hid, atol=1e-5), "cell hidden mismatch"

    # --- whole sequence in one launch (weights resident, hidden in scratch) -
    outs, h_last = rnn_sequence(xs, h0, params)
    jax.block_until_ready((outs, h_last))

    h_ref = h0
    ref_outs = []
    for t in range(seq_len):
        c = jnp.concatenate([xs[t], h_ref], axis=1)
        ref_outs.append(c @ w_i2o.T + b_i2o)
        h_ref = c @ w_i2h.T + b_i2h
    ref_outs = jnp.stack(ref_outs, axis=0)
    assert outs.shape == (seq_len, batch, output_size)
    assert jnp.allclose(outs, ref_outs, atol=1e-4), "sequence outputs mismatch"
    assert jnp.allclose(h_last, h_ref, atol=1e-4), "sequence final hidden mismatch"

    print("KERNEL_OK")
</pallas_src>

<mosaic_0001>
module attributes {stable_mosaic.version = 11 : i64} {
  func.func @_rnn_cell_kernel(%arg0: memref<8x16xf32, #tpu.memory_space<vmem>>, %arg1: memref<8x32xf32, #tpu.memory_space<vmem>>, %arg2: memref<16x128xf32, #tpu.memory_space<vmem>>, %arg3: memref<32x128xf32, #tpu.memory_space<vmem>>, %arg4: memref<1x128xf32, #tpu.memory_space<vmem>>, %arg5: memref<8x128xf32, #tpu.memory_space<vmem>>) attributes {dimension_semantics = [], scalar_prefetch = 0 : i64, scratch_operands = 0 : i64, tpu.core_type = #tpu.core_type<tc>} {
    %c0 = arith.constant 0 : index
    %c0_0 = arith.constant 0 : index
    %0 = vector.load %arg0[%c0, %c0_0] : memref<8x16xf32, #tpu.memory_space<vmem>>, vector<8x16xf32>
    %c0_1 = arith.constant 0 : index
    %c0_2 = arith.constant 0 : index
    %1 = vector.load %arg2[%c0_1, %c0_2] : memref<16x128xf32, #tpu.memory_space<vmem>>, vector<16x128xf32>
    %cst = arith.constant dense<0.000000e+00> : vector<8x128xf32>
    %2 = tpu.matmul %0, %1, %cst {dimension_numbers = #tpu.dot_dimension_numbers<[1], [0], [0], [1], [0, 0, 1, 1], [], []>} : vector<8x16xf32>, vector<16x128xf32>, vector<8x128xf32> -> vector<8x128xf32>
    %c0_3 = arith.constant 0 : index
    %c0_4 = arith.constant 0 : index
    %3 = vector.load %arg1[%c0_3, %c0_4] : memref<8x32xf32, #tpu.memory_space<vmem>>, vector<8x32xf32>
    %c0_5 = arith.constant 0 : index
    %c0_6 = arith.constant 0 : index
    %4 = vector.load %arg3[%c0_5, %c0_6] : memref<32x128xf32, #tpu.memory_space<vmem>>, vector<32x128xf32>
    %cst_7 = arith.constant dense<0.000000e+00> : vector<8x128xf32>
    %5 = tpu.matmul %3, %4, %cst_7 {dimension_numbers = #tpu.dot_dimension_numbers<[1], [0], [0], [1], [0, 0, 1, 1], [], []>} : vector<8x32xf32>, vector<32x128xf32>, vector<8x128xf32> -> vector<8x128xf32>
    %6 = arith.addf %2, %5 : vector<8x128xf32>
    %c0_8 = arith.constant 0 : index
    %c0_9 = arith.constant 0 : index
    %7 = vector.load %arg4[%c0_8, %c0_9] : memref<1x128xf32, #tpu.memory_space<vmem>>, vector<1x128xf32>
    %8 = vector.broadcast %7 : vector<1x128xf32> to vector<8x128xf32>
    %9 = arith.addf %6, %8 : vector<8x128xf32>
    %c0_10 = arith.constant 0 : index
    %c0_11 = arith.constant 0 : index
    %10 = vector.load %arg5[%c0_10, %c0_11] : memref<8x128xf32, #tpu.memory_space<vmem>>, vector<8x128xf32>
    tpu.vector_store %arg5[%c0_10, %c0_11], %9 {strides = array<i32>} : memref<8x128xf32, #tpu.memory_space<vmem>>, vector<8x128xf32>,
    return
  }
}

</mosaic_0001>

<llo_original>
// kernel: tpu_custom_call.1
$region0: #{tpu_custom_call.1}
  #allocation0 [shape = 'u32[]', space=smem, size = 0x4, offset = 0x4, fixed_abs, tag = 'smem constant byte address 0x4 - core index']
  #allocation1 [shape = 'u32[144,128]{1,0:T(1,128)}', space=vmem, size = 0x12000, scoped, tag = 'internal scratch']
  %s0 = inlined_call_operand.hbm [shape: f32[8,16], index: 0, kind: input, shape index: {}]
  %s1 = inlined_call_operand.hbm [shape: f32[8,32], index: 1, kind: input, shape index: {}]
  %s2 = inlined_call_operand.hbm [shape: f32[16,128], index: 2, kind: input, shape index: {}]
  %s3 = inlined_call_operand.hbm [shape: f32[32,128], index: 3, kind: input, shape index: {}]
  %s4 = inlined_call_operand.vmem [shape: f32[1,128], index: 4, kind: input, shape index: {}]
  %s5 = inlined_call_operand.hbm [shape: f32[8,128], index: 5, kind: output, shape index: {}]
  %s6 = sld [smem:[#allocation0]]
  $region46: #{tpu_custom_call.1} parent=0
    _
  %s8 = ssub.s32 1, %s6
  %s9 = scalar_select 0, %s8, %s6
  $region1: #{tpu_custom_call.1} parent=0
    #allocation2 [shape = 'u8[4096]{0}', space=vmem, size = 0x1000, scoped, tag = 'input window, operand 0, single buffered']
    #allocation3 [shape = 's32[1]{0}', space=sflag, size = 0x4, scoped, tag = 'scoped memory for tpu_custom_call.1']
    #allocation4 [shape = 's32[1]{0}', space=sflag, size = 0x4, scoped, tag = 'scoped memory for tpu_custom_call.1']
    #allocation5 [shape = 'u8[4096]{0}', space=vmem, size = 0x1000, scoped, tag = 'input window, operand 1, single buffered']
    #allocation6 [shape = 's32[1]{0}', space=sflag, size = 0x4, scoped, tag = 'scoped memory for tpu_custom_call.1']
    #allocation7 [shape = 'u8[8192]{0}', space=vmem, size = 0x2000, scoped, tag = 'input window, operand 2, single buffered']
    #allocation8 [shape = 'u8[16384]{0}', space=vmem, size = 0x4000, scoped, tag = 'input window, operand 3, single buffered']
    #allocation9 [shape = 's32[1]{0}', space=sflag, size = 0x4, scoped, tag = 'scoped memory for tpu_custom_call.1']
    #allocation10 [shape = 'u8[4096]{0}', space=vmem, size = 0x1000, scoped, tag = 'output window, operand 0, single buffered']
    %10 = vsyncpa [#allocation3], 0
    %11 = vsyncpa [#allocation6], 0
    %12 = vsyncpa [#allocation9], 0
    %13 = vsyncpa [#allocation4], 0
    // Predicated region
    $region2: #{tpu_custom_call.1} parent=1 // pred_check
      _
    $region3: #{tpu_custom_call.1} parent=1 // pred_check_branch
      %15 = sbr.rel (0) target = $region5
    $region4: #{tpu_custom_call.1} parent=1 // pred_region
      %s17 = ssub.s32 128, 128
      %18 = vsyncadd [#allocation3], %s17
      %s20 = sshll.u32 [#allocation2], 4
      %s21 = int_to_ptr.vmem [resolvable:$true] %s20
      %23 = dma.hbm_to_vmem [thread:$0]  %s0, 128, %s21, [#allocation3]
    $region5: #{tpu_custom_call.1} parent=1 // pred_fallthru
      _
    // Predicated region
    $region6: #{tpu_custom_call.1} parent=1 // pred_check
      _
    $region7: #{tpu_custom_call.1} parent=1 // pred_check_branch
      %25 = sbr.rel (0) target = $region9
    $region8: #{tpu_custom_call.1} parent=1 // pred_region
      %s27 = ssub.s32 128, 128
      %28 = vsyncadd [#allocation6], %s27
      %s30 = sshll.u32 [#allocation5], 4
      %s31 = int_to_ptr.vmem [resolvable:$true] %s30
      %33 = dma.hbm_to_vmem [thread:$0]  %s1, 128, %s31, [#allocation6]
    $region9: #{tpu_custom_call.1} parent=1 // pred_fallthru
      _
    // Predicated region
    $region10: #{tpu_custom_call.1} parent=1 // pred_check
      _
    $region11: #{tpu_custom_call.1} parent=1 // pred_check_branch
      %35 = sbr.rel (0) target = $region13
    $region12: #{tpu_custom_call.1} parent=1 // pred_region
      %s37 = ssub.s32 256, 256
      %38 = vsyncadd [#allocation6], %s37
      %s39 = sshll.u32 [#allocation7], 4
      %s40 = int_to_ptr.vmem [resolvable:$true] %s39
      %45 = dma.hbm_to_vmem [thread:$0]  %s2, 256, %s40, [#allocation6], 128, 128, 8
    $region13: #{tpu_custom_call.1} parent=1 // pred_fallthru
      _
    // Predicated region
    $region14: #{tpu_custom_call.1} parent=1 // pred_check
      _
    $region15: #{tpu_custom_call.1} parent=1 // pred_check_branch
      %47 = sbr.rel (0) target = $region17
    $region16: #{tpu_custom_call.1} parent=1 // pred_region
      %s49 = ssub.s32 512, 512
      %50 = vsyncadd [#allocation9], %s49
      %s51 = sshll.u32 [#allocation8], 4
      %s52 = int_to_ptr.vmem [resolvable:$true] %s51
      %57 = dma.hbm_to_vmem [thread:$0]  %s3, 512, %s52, [#allocation9], 128, 128, 8
    $region17: #{tpu_custom_call.1} parent=1 // pred_fallthru
      _
    // Predicated region
    $region18: #{tpu_custom_call.1} parent=1 // pred_check
      _
    $region19: #{tpu_custom_call.1} parent=1 // pred_check_branch
      %59 = sbr.rel (0) target = $region21
    $region20: #{tpu_custom_call.1} parent=1 // pred_region
      _
    $region21: #{tpu_custom_call.1} parent=1 // pred_fallthru
      _
    // Predicated region
    $region22: #{tpu_custom_call.1} parent=1 // pred_check
      _
    $region23: #{tpu_custom_call.1} parent=1 // pred_check_branch
      %61 = sbr.rel (0) target = $region25
    $region24: #{tpu_custom_call.1} parent=1 // pred_region
      %62 = dma.done [#allocation3], 128
    $region25: #{tpu_custom_call.1} parent=1 // pred_fallthru
      _
    // Predicated region
    $region26: #{tpu_custom_call.1} parent=1 // pred_check
      _
    $region27: #{tpu_custom_call.1} parent=1 // pred_check_branch
      %64 = sbr.rel (0) target = $region29
    $region28: #{tpu_custom_call.1} parent=1 // pred_region
      %65 = dma.done [#allocation6], 128
    $region29: #{tpu_custom_call.1} parent=1 // pred_fallthru
      _
    // Predicated region
    $region30: #{tpu_custom_call.1} parent=1 // pred_check
      _
    $region31: #{tpu_custom_call.1} parent=1 // pred_check_branch
      %67 = sbr.rel (0) target = $region33
    $region32: #{tpu_custom_call.1} parent=1 // pred_region
      %68 = dma.done [#allocation6], 256
    $region33: #{tpu_custom_call.1} parent=1 // pred_fallthru
      _
    // Predicated region
    $region34: #{tpu_custom_call.1} parent=1 // pred_check
      _
    $region35: #{tpu_custom_call.1} parent=1 // pred_check_branch
      %70 = sbr.rel (0) target = $region37
    $region36: #{tpu_custom_call.1} parent=1 // pred_region
      %71 = dma.done [#allocation9], 512
    $region37: #{tpu_custom_call.1} parent=1 // pred_fallthru
      _
    %v72 = vld [vmem:[#allocation2] sm:$0xff]
    %v73 = vld [vmem:[#allocation7] sm:$0xff]
    %v74 = vld [vmem:[#allocation7 + $0x8] sm:$0xff]
    %v75 = vld [vmem:[#allocation5] sm:$0xff]
    %v76 = vld [vmem:[#allocation8] sm:$0xff]
    %v77 = vld [vmem:[#allocation8 + $0x8] sm:$0xff]
    %v78 = vld [vmem:[#allocation8 + $0x10] sm:$0xff]
    %v79 = vld [vmem:[#allocation8 + $0x18] sm:$0xff]
    %vm80 = vcmask 261120
    %v82 = vsel %vm80, %v75, 0
    %84 = vmatprep.subr.mxu0 0.0
    %85 = vmatpush1.msra.mxu0 %v76
    %86 = vmatprep.subr.mxu0 0.0
    %87 = vmatpush1.msra.mxu0 %v77
    %88 = vmatprep.subr.mxu0 0.0
    %89 = vmatpush1.msra.mxu0 %v78
    %90 = vmatprep.subr.mxu0 0.0
    %91 = vmatpush1.msra.mxu0 %v79
    %92 = vmatprep.subr.mxu0 0.0
    %93 = vmatpush1.msra.mxu0 0.0
    %94 = vmatprep.subr.mxu0 0.0
    %95 = vmatpush1.msra.mxu0 0.0
    %96 = vmatprep.subr.mxu0 0.0
    %97 = vmatpush1.msra.mxu0 0.0
    %98 = vmatprep.subr.mxu0 0.0
    %99 = vmatpush1.msra.mxu0 0.0
    %100 = vmatprep.subr.mxu0 0.0
    %101 = vmatpush1.msra.mxu0 0.0
    %102 = vmatprep.subr.mxu0 0.0
    %103 = vmatpush1.msra.mxu0 0.0
    %104 = vmatprep.subr.mxu0 0.0
    %105 = vmatpush1.msra.mxu0 0.0
    %106 = vmatprep.subr.mxu0 0.0
    %107 = vmatpush1.msra.mxu0 0.0
    %108 = vmatprep.subr.mxu0 0.0
    %109 = vmatpush1.msra.mxu0 0.0
    %110 = vmatprep.subr.mxu0 0.0
    %111 = vmatpush1.msra.mxu0 0.0
    %112 = vmatprep.subr.mxu0 0.0
    %113 = vmatpush1.msra.mxu0 0.0
    %114 = vmatprep.subr.mxu0 0.0
    %115 = vmatpush1.msra.mxu0 0.0
    %116 = vmatprep.subr.mxu0 0.0
    %117 = vmatpush1.msra.mxu0 0.0
    %118 = vmatprep.subr.mxu0 0.0
    %119 = vmatpush1.msra.mxu0 0.0
    %120 = vmatprep.subr.mxu0 0.0
    %121 = vmatpush1.msra.mxu0 0.0
    %122 = vmatprep.subr.mxu0 0.0
    %123 = vmatpush1.msra.mxu0 0.0
    %124 = vmatprep.subr.mxu0 0.0
    %125 = vmatpush1.msra.mxu0 0.0
    %126 = vmatprep.subr.mxu0 0.0
    %127 = vmatpush1.msra.mxu0 0.0
    %128 = vmatprep.subr.mxu0 0.0
    %129 = vmatpush1.msra.mxu0 0.0
    %130 = vmatprep.subr.mxu0 0.0
    %131 = vmatpush1.msra.mxu0 0.0
    %132 = vmatprep.subr.mxu0 0.0
    %133 = vmatpush1.msra.mxu0 0.0
    %134 = vmatprep.subr.mxu0 0.0
    %135 = vmatpush1.msra.mxu0 0.0
    %136 = vmatprep.subr.mxu0 0.0
    %137 = vmatpush1.msra.mxu0 0.0
    %138 = vmatprep.subr.mxu0 0.0
    %139 = vmatpush1.msra.mxu0 0.0
    %140 = vmatprep.subr.mxu0 0.0
    %141 = vmatpush1.msra.mxu0 0.0
    %142 = vmatprep.subr.mxu0 0.0
    %143 = vmatpush1.msra.mxu0 0.0
    %144 = vmatprep.subr.mxu0 0.0
    %145 = vmatpush1.msra.mxu0 0.0
    %146 = vmatprep.subr.mxu0 0.0
    %147 = vmatpush1.msra.mxu0 0.0
    %148 = vmatprep.mubr.f32.mxu0 0.0
    %149 = vmatmul.mubr.f32.gmra.mrb[0].mxu0 %v82
    %v150 = vpop.f32.mrb[0].mxu0
    %v151 = vadd.f32 0.0, %v150
    %v152 = vpop.f32.mrb[0].mxu0
    %153 = vdwg.mxu0
    %vm154 = vcmask 130048
    %v156 = vsel %vm154, %v72, 0
    %158 = vmatprep.subr.mxu0 0.0
    %159 = vmatpush1.msra.mxu0 %v73
    %160 = vmatprep.subr.mxu0 0.0
    %161 = vmatpush1.msra.mxu0 %v74
    %162 = vmatprep.subr.mxu0 0.0
    %163 = vmatpush1.msra.mxu0 0.0
    %164 = vmatprep.subr.mxu0 0.0
    %165 = vmatpush1.msra.mxu0 0.0
    %166 = vmatprep.subr.mxu0 0.0
    %167 = vmatpush1.msra.mxu0 0.0
    %168 = vmatprep.subr.mxu0 0.0
    %169 = vmatpush1.msra.mxu0 0.0
    %170 = vmatprep.subr.mxu0 0.0
    %171 = vmatpush1.msra.mxu0 0.0
    %172 = vmatprep.subr.mxu0 0.0
    %173 = vmatpush1.msra.mxu0 0.0
    %174 = vmatprep.subr.mxu0 0.0
    %175 = vmatpush1.msra.mxu0 0.0
    %176 = vmatprep.subr.mxu0 0.0
    %177 = vmatpush1.msra.mxu0 0.0
    %178 = vmatprep.subr.mxu0 0.0
    %179 = vmatpush1.msra.mxu0 0.0
    %180 = vmatprep.subr.mxu0 0.0
    %181 = vmatpush1.msra.mxu0 0.0
    %182 = vmatprep.subr.mxu0 0.0
    %183 = vmatpush1.msra.mxu0 0.0
    %184 = vmatprep.subr.mxu0 0.0
    %185 = vmatpush1.msra.mxu0 0.0
    %186 = vmatprep.subr.mxu0 0.0
    %187 = vmatpush1.msra.mxu0 0.0
    %188 = vmatprep.subr.mxu0 0.0
    %189 = vmatpush1.msra.mxu0 0.0
    %190 = vmatprep.subr.mxu0 0.0
    %191 = vmatpush1.msra.mxu0 0.0
    %192 = vmatprep.subr.mxu0 0.0
    %193 = vmatpush1.msra.mxu0 0.0
    %194 = vmatprep.subr.mxu0 0.0
    %195 = vmatpush1.msra.mxu0 0.0
    %196 = vmatprep.subr.mxu0 0.0
    %197 = vmatpush1.msra.mxu0 0.0
    %198 = vmatprep.subr.mxu0 0.0
    %199 = vmatpush1.msra.mxu0 0.0
    %200 = vmatprep.subr.mxu0 0.0
    %201 = vmatpush1.msra.mxu0 0.0
    %202 = vmatprep.subr.mxu0 0.0
    %203 = vmatpush1.msra.mxu0 0.0
    %204 = vmatprep.subr.mxu0 0.0
    %205 = vmatpush1.msra.mxu0 0.0
    %206 = vmatprep.subr.mxu0 0.0
    %207 = vmatpush1.msra.mxu0 0.0
    %208 = vmatprep.subr.mxu0 0.0
    %209 = vmatpush1.msra.mxu0 0.0
    %210 = vmatprep.subr.mxu0 0.0
    %211 = vmatpush1.msra.mxu0 0.0
    %212 = vmatprep.subr.mxu0 0.0
    %213 = vmatpush1.msra.mxu0 0.0
    %214 = vmatprep.subr.mxu0 0.0
    %215 = vmatpush1.msra.mxu0 0.0
    %216 = vmatprep.subr.mxu0 0.0
    %217 = vmatpush1.msra.mxu0 0.0
    %218 = vmatprep.subr.mxu0 0.0
    %219 = vmatpush1.msra.mxu0 0.0
    %220 = vmatprep.subr.mxu0 0.0
    %221 = vmatpush1.msra.mxu0 0.0
    %222 = vmatprep.mubr.f32.mxu0 0.0
    %223 = vmatmul.mubr.f32.gmra.mrb[0].mxu0 %v156
    %v224 = vpop.f32.mrb[0].mxu0
    %v225 = vadd.f32 %v151, %v224
    %v226 = vpop.f32.mrb[0].mxu0
    %227 = vdwg.mxu0
    %v228 = vld [vmem:[%s4] sm:$0x1]
    %v230 = vlaneseq
    %v231 = vshrl.u32 %v230, 7
    %v232 = vsub.s32 0, %v231
    %v233 = vrot.slane %v228, %v232
    %v235 = vadd.f32 %v225, %v233
    %236 = vst [vmem:[#allocation10] sm:$0xff] %v235
    // Predicated region
    $region38: #{tpu_custom_call.1} parent=1 // pred_check
      _
    $region39: #{tpu_custom_call.1} parent=1 // pred_check_branch
      %238 = sbr.rel (0) target = $region41
    $region40: #{tpu_custom_call.1} parent=1 // pred_region
      %s240 = ssub.s32 128, 128
      %241 = vsyncadd [#allocation4], %s240
      %s243 = sshll.u32 [#allocation10], 4
      %s244 = int_to_ptr.vmem [resolvable:$true] %s243
      %246 = dma.vmem_to_hbm [thread:$0]  %s244, 128, %s5, [#allocation4]
    $region41: #{tpu_custom_call.1} parent=1 // pred_fallthru
      _
    // Predicated region
    $region42: #{tpu_custom_call.1} parent=1 // pred_check
      _
    $region43: #{tpu_custom_call.1} parent=1 // pred_check_branch
      %248 = sbr.rel (0) target = $region45
    $region44: #{tpu_custom_call.1} parent=1 // pred_region
      %249 = dma.done [#allocation4], 128
    $region45: #{tpu_custom_call.1} parent=1 // pred_fallthru
      _
    %250 = vsyncpa [#allocation3], 1
    %251 = vsyncpa [#allocation6], 1
    %252 = vsyncpa [#allocation9], 1
    %253 = vsyncpa [#allocation4], 1

</llo_original>
